<compile_context>
chip_gen: v7x
topology: tpu7x:2x2x1
jax: 0.10.0
libtpu: 0.0.40
codegen_flags: <defaults>
</compile_context>

<pallas_src>
import functools

import jax
import jax.numpy as jnp
import numpy as np
from jax import lax
from jax.experimental import pallas as pl
from jax.experimental.pallas import tpu as pltpu


# ----- module's deterministic parameter construction -------------------------
def int_log_2(x):
    return int(x).bit_length() - 1        # exact for powers of two


def kernel_Ntxtr(k):
    a = np.eye(k ** 2, dtype=np.float32)
    return a.reshape(-1, 1, k, k)         # (k*k, 1, k, k) identity stack


def _round_up(x, m):
    return ((x + m - 1) // m) * m


# ----------------------------- Pallas kernels --------------------------------
def _copy_kernel(x_ref, o_ref):
    # Identity-weight conv == copy of the im2col patch matrix (lane-dense).
    o_ref[...] = x_ref[...]


def pallas_identity_conv(patches):
    M, N = patches.shape
    return pl.pallas_call(
        _copy_kernel,
        out_shape=jax.ShapeDtypeStruct((M, N), patches.dtype),
    )(patches)


def _matmul_kernel(p_ref, w_ref, o_ref, acc_ref):
    # grid = (M/tm, N/tn, K/tk); K (reduction) is the last, "arbitrary" axis.
    @pl.when(pl.program_id(2) == 0)
    def _():
        acc_ref[...] = jnp.zeros_like(acc_ref)

    acc_ref[...] += jnp.dot(p_ref[...], w_ref[...],
                            preferred_element_type=jnp.float32)

    @pl.when(pl.program_id(2) == pl.num_programs(2) - 1)
    def _():
        o_ref[...] = acc_ref[...].astype(o_ref.dtype)


def pallas_matmul(patches, w_t, *, tm, tn, tk):
    M, K = patches.shape
    K2, N = w_t.shape
    assert K == K2 and M % tm == 0 and N % tn == 0 and K % tk == 0
    grid = (M // tm, N // tn, K // tk)
    bytes_accessed = (M * K * patches.dtype.itemsize
                      + K * N * w_t.dtype.itemsize
                      + M * N * 4)
    return pl.pallas_call(
        _matmul_kernel,
        out_shape=jax.ShapeDtypeStruct((M, N), jnp.float32),
        grid_spec=pltpu.PrefetchScalarGridSpec(
            num_scalar_prefetch=0,
            grid=grid,
            in_specs=[pl.BlockSpec((tm, tk), lambda i, j, k: (i, k)),
                      pl.BlockSpec((tk, tn), lambda i, j, k: (k, j))],
            out_specs=pl.BlockSpec((tm, tn), lambda i, j, k: (i, j)),
            scratch_shapes=[pltpu.VMEM((tm, tn), jnp.float32)]),
        compiler_params=pltpu.CompilerParams(
            dimension_semantics=("parallel", "parallel", "arbitrary"),
            vmem_limit_bytes=32 * 1024 * 1024),
        cost_estimate=pl.CostEstimate(flops=2 * M * N * K,
                                      transcendentals=0,
                                      bytes_accessed=bytes_accessed),
    )(patches, w_t)


# ------------------------------ host-side prep -------------------------------
def prepare_weight(weight, dtype=jnp.bfloat16):
    """Hoisted weight preprocessing (done once, outside the per-call path):
    flatten the OIHW conv weight to (K = Cin*k*k, N = Cout), matching the
    im2col column order (cin, kh, kw).  bf16 storage is exact for the 0/1
    identity weight and halves the HBM weight stream of the matmul path."""
    w = np.asarray(weight, dtype=np.float32)
    cout = w.shape[0]
    return jnp.asarray(w.reshape(cout, -1).T, dtype=dtype)


def is_identity_stack(weight, k):
    """True iff weight == kernel_Ntxtr(k): conv is a pure rearrangement of the
    input and the 4096x4096 matmul (and its weight stream) can be skipped."""
    w = np.asarray(weight, dtype=np.float32)
    if w.shape != (k * k, 1, k, k):
        return False
    return bool(np.array_equal(w.reshape(k * k, k * k),
                               np.eye(k * k, dtype=np.float32)))


# ------------------------------- forward glue --------------------------------
def _im2col(x, k, stride, dilation):
    B, Cin, H, W = x.shape
    dk = dilation * (k - 1) + 1
    Ho = (H - dk) // stride + 1
    Wo = (W - dk) // stride + 1
    if dilation == 1 and stride == k and H == Ho * k and W == Wo * k:
        # Non-overlapping patches: pure reshape/transpose, no gather.
        p = x.reshape(B, Cin, Ho, k, Wo, k)
    else:
        ih = (jnp.arange(Ho) * stride)[:, None] + dilation * jnp.arange(k)[None, :]
        iw = (jnp.arange(Wo) * stride)[:, None] + dilation * jnp.arange(k)[None, :]
        p = x[:, :, ih, :][:, :, :, :, iw]            # (B, Cin, Ho, k, Wo, k)
    p = p.transpose(0, 2, 4, 1, 3, 5).reshape(B * Ho * Wo, Cin * k * k)
    return p, Ho, Wo


def im2txtr_forward(x, w_t, *, k, stride, dilation, cout, identity_fast_path):
    """Equivalent of im2txtrTnzr04.forward: x -> conv_64_1(x) (NCHW in/out)."""
    B = x.shape[0]
    patches, Ho, Wo = _im2col(x.astype(jnp.float32), k, stride, dilation)
    M, Kdim = patches.shape

    if identity_fast_path:
        # Weight is the identity stack: conv output == patch matrix (exact f32).
        out_flat = pallas_identity_conv(patches)
    else:
        tm = 16                                    # bf16 (16,128) sublane tile
        tn = min(2048, _round_up(cout, 128))       # >= 2 N tiles when N = 4096
        tk = min(1024, _round_up(Kdim, 128))
        Mp, Kp, Np = _round_up(M, tm), _round_up(Kdim, tk), _round_up(cout, tn)

        p = patches.astype(jnp.bfloat16)
        if (Mp, Kp) != (M, Kdim):
            p = jnp.zeros((Mp, Kp), jnp.bfloat16).at[:M, :Kdim].set(p)
        wt = w_t
        if wt.shape != (Kp, Np):                   # skip the pad when it's a no-op
            wt = jnp.zeros((Kp, Np), wt.dtype).at[:Kdim, :cout].set(wt)
        out_flat = pallas_matmul(p, wt, tm=tm, tn=tn, tk=tk)[:M, :cout]

    # TODO(synk): forward() also has a side-effecting print(x.shape) and
    # numpy/list round-trip conversions; host-side glue, not kernel work.
    return out_flat.reshape(B, Ho, Wo, cout).transpose(0, 3, 1, 2)   # NCHW


# ----------------------------------- main -------------------------------------
if __name__ == "__main__":
    # Config implied by the module: forward() hard-codes conv_64_1, so w_=64,
    # dilation=1; in_channels = imageSize[-1] = 1; spatial must be >= 64.
    param = {'imageSize': (64, 64, 1), 'dilation': (1,), 'w_': (64,)}
    w_, dl_z = param['w_'][0], param['dilation'][0]
    stride = 2 ** int_log_2(w_)                    # 64, as in the module
    W5 = kernel_Ntxtr(w_)                          # (4096, 1, 64, 64)
    weight = jnp.asarray(W5, dtype=jnp.float32)

    # Hoisted / constant-folded weight preprocessing (once, not per call).
    w_t = prepare_weight(W5)                       # (4096, 4096) bf16
    fast = is_identity_stack(W5, w_) and stride == w_ and dl_z == 1

    B, Cin = 2, param['imageSize'][-1]
    H, Wd = param['imageSize'][0], param['imageSize'][1]
    x = jax.random.normal(jax.random.PRNGKey(0), (B, Cin, H, Wd), jnp.float32)

    fwd = jax.jit(functools.partial(
        im2txtr_forward, k=w_, stride=stride, dilation=dl_z, cout=w_ ** 2,
        identity_fast_path=fast))
    out = jax.block_until_ready(fwd(x, w_t))

    # pure-JAX f32 reference (HIGHEST precision so the exact fast path matches)
    ref = lax.conv_general_dilated(
        x, weight, (stride, stride), 'VALID',
        rhs_dilation=(dl_z, dl_z),
        dimension_numbers=('NCHW', 'OIHW', 'NCHW'),
        precision=lax.Precision.HIGHEST)
    assert out.shape == ref.shape == (B, w_ ** 2, 1, 1)
    np.testing.assert_allclose(np.asarray(out), np.asarray(ref),
                               rtol=1e-5, atol=1e-5)

    # Also exercise the general Pallas matmul path (used for non-identity
    # weights).  Operands are bf16 (weight exact in bf16, patches are not),
    # f32 accumulation -> relaxed tolerance.
    fwd_gen = jax.jit(functools.partial(
        im2txtr_forward, k=w_, stride=stride, dilation=dl_z, cout=w_ ** 2,
        identity_fast_path=False))
    out_gen = jax.block_until_ready(fwd_gen(x, w_t))
    np.testing.assert_allclose(np.asarray(out_gen), np.asarray(ref),
                               rtol=2e-2, atol=2e-2)

    print("KERNEL_OK")
</pallas_src>

<mosaic_0001>
module attributes {stable_mosaic.version = 11 : i64} {
  func.func @_copy_kernel(%arg0: memref<2x4096xf32, #tpu.memory_space<vmem>>, %arg1: memref<2x4096xf32, #tpu.memory_space<vmem>>) attributes {dimension_semantics = [], scalar_prefetch = 0 : i64, scratch_operands = 0 : i64, tpu.core_type = #tpu.core_type<tc>} {
    %c0 = arith.constant 0 : index
    %c0_0 = arith.constant 0 : index
    %0 = vector.load %arg0[%c0, %c0_0] : memref<2x4096xf32, #tpu.memory_space<vmem>>, vector<2x4096xf32>
    %c0_1 = arith.constant 0 : index
    %c0_2 = arith.constant 0 : index
    %1 = vector.load %arg1[%c0_1, %c0_2] : memref<2x4096xf32, #tpu.memory_space<vmem>>, vector<2x4096xf32>
    tpu.vector_store %arg1[%c0_1, %c0_2], %0 {strides = array<i32>} : memref<2x4096xf32, #tpu.memory_space<vmem>>, vector<2x4096xf32>,
    return
  }
}

</mosaic_0001>

<llo_original>
// kernel: im2txtr_forward.1
$region0: #{im2txtr_forward.1}
  #allocation0 [shape = 'u32[]', space=smem, size = 0x4, offset = 0x4, fixed_abs, tag = 'smem constant byte address 0x4 - core index']
  #allocation1 [shape = 'u32[144,128]{1,0:T(1,128)}', space=vmem, size = 0x12000, scoped, tag = 'internal scratch']
  %s0 = inlined_call_operand.vmem [shape: f32[2,4096], index: 0, kind: input, shape index: {}]
  %s1 = inlined_call_operand.vmem [shape: f32[2,4096], index: 1, kind: output, shape index: {}]
  %s2 = sld [smem:[#allocation0]]
  $region14: #{im2txtr_forward.1} parent=0
    _
  %s4 = ssub.s32 1, %s2
  %s5 = scalar_select 0, %s4, %s2
  // Predicated region
  $region2: #{im2txtr_forward.1} parent=0 // pred_check
    _
  $region3: #{im2txtr_forward.1} parent=0 // pred_check_branch
    %7 = sbr.rel (0) target = $region5
  $region4: #{im2txtr_forward.1} parent=0 // pred_region
    _
  $region5: #{im2txtr_forward.1} parent=0 // pred_fallthru
    _
  %v8 = vld [vmem:[%s0] sm:$0xff]
  %v9 = vld [vmem:[%s0 + $0x8] sm:$0xff]
  %v10 = vld [vmem:[%s0 + $0x10] sm:$0xff]
  %v11 = vld [vmem:[%s0 + $0x18] sm:$0xff]
  %v12 = vld [vmem:[%s0 + $0x20] sm:$0xff]
  %v13 = vld [vmem:[%s0 + $0x28] sm:$0xff]
  %v14 = vld [vmem:[%s0 + $0x30] sm:$0xff]
  %v15 = vld [vmem:[%s0 + $0x38] sm:$0xff]
  %16 = vst [vmem:[%s1] sm:$0xff] %v8
  %17 = vst [vmem:[%s1 + $0x8] sm:$0xff] %v9
  %18 = vst [vmem:[%s1 + $0x10] sm:$0xff] %v10
  %19 = vst [vmem:[%s1 + $0x18] sm:$0xff] %v11
  %20 = vst [vmem:[%s1 + $0x20] sm:$0xff] %v12
  %21 = vst [vmem:[%s1 + $0x28] sm:$0xff] %v13
  %22 = vst [vmem:[%s1 + $0x30] sm:$0xff] %v14
  %23 = vst [vmem:[%s1 + $0x38] sm:$0xff] %v15
  // Predicated region
  $region6: #{im2txtr_forward.1} parent=0 // pred_check
    _
  $region7: #{im2txtr_forward.1} parent=0 // pred_check_branch
    %25 = sbr.rel (0) target = $region9
  $region8: #{im2txtr_forward.1} parent=0 // pred_region
    _
  $region9: #{im2txtr_forward.1} parent=0 // pred_fallthru
    _
  // Predicated region
  $region10: #{im2txtr_forward.1} parent=0 // pred_check
    _
  $region11: #{im2txtr_forward.1} parent=0 // pred_check_branch
    %27 = sbr.rel (0) target = $region13
  $region12: #{im2txtr_forward.1} parent=0 // pred_region
    _
  $region13: #{im2txtr_forward.1} parent=0 // pred_fallthru
    _

</llo_original>
